<compile_context>
chip_gen: v6e
topology: v6e:2x2x1
jax: 0.10.0
libtpu: 0.0.40
codegen_flags: <defaults>
</compile_context>

<pallas_src>
import functools

import jax
import jax.numpy as jnp
from jax.experimental import pallas as pl
from jax.experimental.pallas import tpu as pltpu


# ----------------------------------------------------------------------------
# Fused Pallas kernel: both embedding projections in one grid step.
#   user:  [TM, 24] @ [24, 16] + [1, 16] -> [TM, 16]
#   item:  [TM, 18] @ [18, 16] + [1, 16] -> [TM, 16]
# Weights / biases are grid-resident; row tiles stream through the pipeline.
# ----------------------------------------------------------------------------
def _fused_embed_kernel(xu_ref, xi_ref, wu_ref, bu_ref, wi_ref, bi_ref,
                        ou_ref, oi_ref):
    u = jnp.dot(xu_ref[...], wu_ref[...], preferred_element_type=jnp.float32)
    ou_ref[...] = (u + bu_ref[...]).astype(ou_ref.dtype)
    i = jnp.dot(xi_ref[...], wi_ref[...], preferred_element_type=jnp.float32)
    oi_ref[...] = (i + bi_ref[...]).astype(oi_ref.dtype)


def _round_up(x, m):
    return ((x + m - 1) // m) * m


# Conservative per-call VMEM budget (bytes). Default scoped VMEM is 16-32 MiB
# depending on chip; stay well inside it (double-buffered tiles + weights).
_VMEM_BUDGET = 24 << 20


@functools.partial(jax.jit, static_argnames=("tm",))
def fused_embeddings(x_user, x_item, user_w_t, user_b, item_w_t, item_b,
                     *, tm=8192):
    """Computes (x_user @ Wu + bu, x_item @ Wi + bi) in one pallas_call.

    x_user: [Nu, 24] f32, x_item: [Ni, 18] f32.
    *_w_t are pre-transposed to (in, out); *_b are (out,).
    tm: requested row-tile size (rounded to a multiple of 8, clamped to the
        data size and the VMEM budget).
    """
    nu, du = x_user.shape
    ni, di = x_item.shape
    dout = user_w_t.shape[1]
    itemsize = jnp.dtype(x_user.dtype).itemsize

    # --- choose the row tile --------------------------------------------
    # Biggest tile wins for this mem-bound kernel (fewer ~0.35us grid steps),
    # but it must fit the double-buffered VMEM working set.
    bytes_per_row = itemsize * (du + di + 2 * dout)          # in + out tiles
    tm_vmem_cap = _VMEM_BUDGET // (2 * bytes_per_row)        # 2x: dbl-buffer
    n_max = max(nu, ni)
    tm = max(8, min((tm // 8) * 8,
                    (tm_vmem_cap // 8) * 8,
                    _round_up(n_max, 8)))
    n_pad = _round_up(n_max, tm)
    grid = (n_pad // tm,)

    # --- pad rows to the common tiled extent (only if needed) ------------
    xu = x_user if n_pad == nu else jnp.pad(x_user, ((0, n_pad - nu), (0, 0)))
    xi = x_item if n_pad == ni else jnp.pad(x_item, ((0, n_pad - ni), (0, 0)))
    bu2 = user_b.reshape(1, dout)
    bi2 = item_b.reshape(1, dout)

    cost = pl.CostEstimate(
        flops=2 * n_pad * (du + di) * dout,
        transcendentals=0,
        bytes_accessed=itemsize * (n_pad * (du + di)              # inputs
                                   + (du + di) * dout + 2 * dout  # W / b
                                   + 2 * n_pad * dout),           # outputs
    )

    out_u, out_i = pl.pallas_call(
        _fused_embed_kernel,
        out_shape=(
            jax.ShapeDtypeStruct((n_pad, dout), x_user.dtype),
            jax.ShapeDtypeStruct((n_pad, dout), x_item.dtype),
        ),
        grid_spec=pl.GridSpec(
            grid=grid,
            in_specs=[
                pl.BlockSpec((tm, du), lambda i: (i, 0)),     # x_user tile
                pl.BlockSpec((tm, di), lambda i: (i, 0)),     # x_item tile
                pl.BlockSpec((du, dout), lambda i: (0, 0)),   # Wu (resident)
                pl.BlockSpec((1, dout), lambda i: (0, 0)),    # bu (resident)
                pl.BlockSpec((di, dout), lambda i: (0, 0)),   # Wi (resident)
                pl.BlockSpec((1, dout), lambda i: (0, 0)),    # bi (resident)
            ],
            out_specs=(
                pl.BlockSpec((tm, dout), lambda i: (i, 0)),
                pl.BlockSpec((tm, dout), lambda i: (i, 0)),
            ),
        ),
        compiler_params=pltpu.CompilerParams(
            dimension_semantics=("parallel",),   # shards across v7x's 2 TCs
            vmem_limit_bytes=64 << 20,
        ),
        cost_estimate=cost,
    )(xu, xi, user_w_t, bu2, item_w_t, bi2)

    return out_u[:nu], out_i[:ni]


# ----------------------------------------------------------------------------
# Ultra forward (the parts owned by this module).
# ----------------------------------------------------------------------------
def ultra_forward(params, x_user, x_item, batch, *, tm=8192):
    # user_embedding / item_embedding : fused single pallas_call.
    user_embedding, item_embedding = fused_embeddings(
        x_user, x_item,
        params["user_w_t"], params["user_b"],
        params["item_w_t"], params["item_b"],
        tm=tm)
    # query_rels = batch[:, 0, 2]   (pure indexing glue, stays in JAX)
    query_rels = batch[:, 0, 2]
    # TODO(synk): relation_representations = relation_model(relation_graph, query=query_rels)
    # TODO(synk): score = entity_model(data, relation_representations, batch,
    #                                  user_embedding, item_embedding)
    return user_embedding, item_embedding, query_rels


def init_params(key):
    """Deterministic PyTorch-style init (uniform +-1/sqrt(fan_in))."""
    k1, k2, k3, k4 = jax.random.split(key, 4)
    # item_embedding: nn.Linear(18, 16) -> weight (16, 18), bias (16,)
    bound_i = 1.0 / jnp.sqrt(18.0)
    item_w = jax.random.uniform(k1, (16, 18), jnp.float32, -bound_i, bound_i)
    item_b = jax.random.uniform(k2, (16,), jnp.float32, -bound_i, bound_i)
    # user_embedding: nn.Linear(24, 16) -> weight (16, 24), bias (16,)
    bound_u = 1.0 / jnp.sqrt(24.0)
    user_w = jax.random.uniform(k3, (16, 24), jnp.float32, -bound_u, bound_u)
    user_b = jax.random.uniform(k4, (16,), jnp.float32, -bound_u, bound_u)
    return {
        "item_w_t": item_w.T,   # (18, 16)
        "item_b": item_b,
        "user_w_t": user_w.T,   # (24, 16)
        "user_b": user_b,
    }


if __name__ == "__main__":
    key = jax.random.PRNGKey(0)
    kp, ku, ki, kb = jax.random.split(key, 4)

    params = init_params(kp)

    # Small but unequal row counts; tm=16 exercises the multi-block row grid
    # (48 padded rows -> 3 grid steps) and the padding/slicing path.
    n_user, n_item = 24, 40
    x_user = jax.random.normal(ku, (n_user, 24), jnp.float32)   # data.x_user
    x_item = jax.random.normal(ki, (n_item, 18), jnp.float32)   # data.x_item
    # batch of (head, tail, relation) triples: [B, num_samples, 3]
    batch = jax.random.randint(kb, (2, 4, 3), 0, 8, jnp.int32)

    user_emb, item_emb, query_rels = ultra_forward(
        params, x_user, x_item, batch, tm=16)
    jax.block_until_ready((user_emb, item_emb, query_rels))

    # sanity check against plain-JAX reference
    ref_user = x_user @ params["user_w_t"] + params["user_b"]
    ref_item = x_item @ params["item_w_t"] + params["item_b"]
    assert user_emb.shape == (n_user, 16)
    assert item_emb.shape == (n_item, 16)
    assert query_rels.shape == (2,)
    assert jnp.allclose(user_emb, ref_user, atol=1e-5)
    assert jnp.allclose(item_emb, ref_item, atol=1e-5)

    # also exercise the large-tile (single-block) default path
    user_emb2, item_emb2, _ = ultra_forward(params, x_user, x_item, batch)
    jax.block_until_ready((user_emb2, item_emb2))
    assert jnp.allclose(user_emb2, ref_user, atol=1e-5)
    assert jnp.allclose(item_emb2, ref_item, atol=1e-5)

    print("KERNEL_OK")
</pallas_src>

<mosaic_0001>
module attributes {stable_mosaic.version = 11 : i64} {
  func.func @_fused_embed_kernel(%arg0: i32, %arg1: memref<16x24xf32, #tpu.memory_space<vmem>>, %arg2: memref<16x18xf32, #tpu.memory_space<vmem>>, %arg3: memref<24x16xf32, #tpu.memory_space<vmem>>, %arg4: memref<1x16xf32, #tpu.memory_space<vmem>>, %arg5: memref<18x16xf32, #tpu.memory_space<vmem>>, %arg6: memref<1x16xf32, #tpu.memory_space<vmem>>, %arg7: memref<16x16xf32, #tpu.memory_space<vmem>>, %arg8: memref<16x16xf32, #tpu.memory_space<vmem>>) attributes {dimension_semantics = [#tpu.dimension_semantics<parallel>], iteration_bounds = array<i64: 3>, scalar_prefetch = 0 : i64, scratch_operands = 0 : i64, tpu.core_type = #tpu.core_type<tc>, window_params = [{transform_indices = @transform_0, window_bounds = array<i64: 16, 24>}, {transform_indices = @transform_1, window_bounds = array<i64: 16, 18>}, {pipeline_mode = #tpu.pipeline_mode<synchronous>, transform_indices = @transform_2, window_bounds = array<i64: 24, 16>}, {pipeline_mode = #tpu.pipeline_mode<synchronous>, transform_indices = @transform_3, window_bounds = array<i64: 1, 16>}, {pipeline_mode = #tpu.pipeline_mode<synchronous>, transform_indices = @transform_4, window_bounds = array<i64: 18, 16>}, {pipeline_mode = #tpu.pipeline_mode<synchronous>, transform_indices = @transform_5, window_bounds = array<i64: 1, 16>}, {transform_indices = @transform_6, window_bounds = array<i64: 16, 16>}, {transform_indices = @transform_7, window_bounds = array<i64: 16, 16>}]} {
    %c0 = arith.constant 0 : index
    %c0_0 = arith.constant 0 : index
    %0 = vector.load %arg1[%c0, %c0_0] : memref<16x24xf32, #tpu.memory_space<vmem>>, vector<16x24xf32>
    %c0_1 = arith.constant 0 : index
    %c0_2 = arith.constant 0 : index
    %1 = vector.load %arg3[%c0_1, %c0_2] : memref<24x16xf32, #tpu.memory_space<vmem>>, vector<24x16xf32>
    %cst = arith.constant dense<0.000000e+00> : vector<16x16xf32>
    %2 = tpu.matmul %0, %1, %cst {dimension_numbers = #tpu.dot_dimension_numbers<[1], [0], [0], [1], [0, 0, 1, 1], [], []>} : vector<16x24xf32>, vector<24x16xf32>, vector<16x16xf32> -> vector<16x16xf32>
    %c0_3 = arith.constant 0 : index
    %c0_4 = arith.constant 0 : index
    %3 = vector.load %arg4[%c0_3, %c0_4] : memref<1x16xf32, #tpu.memory_space<vmem>>, vector<1x16xf32>
    %4 = vector.broadcast %3 : vector<1x16xf32> to vector<16x16xf32>
    %5 = arith.addf %2, %4 : vector<16x16xf32>
    %c0_5 = arith.constant 0 : index
    %c0_6 = arith.constant 0 : index
    %6 = vector.load %arg7[%c0_5, %c0_6] : memref<16x16xf32, #tpu.memory_space<vmem>>, vector<16x16xf32>
    tpu.vector_store %arg7[%c0_5, %c0_6], %5 {strides = array<i32>} : memref<16x16xf32, #tpu.memory_space<vmem>>, vector<16x16xf32>,
    %c0_7 = arith.constant 0 : index
    %c0_8 = arith.constant 0 : index
    %7 = vector.load %arg2[%c0_7, %c0_8] : memref<16x18xf32, #tpu.memory_space<vmem>>, vector<16x18xf32>
    %c0_9 = arith.constant 0 : index
    %c0_10 = arith.constant 0 : index
    %8 = vector.load %arg5[%c0_9, %c0_10] : memref<18x16xf32, #tpu.memory_space<vmem>>, vector<18x16xf32>
    %cst_11 = arith.constant dense<0.000000e+00> : vector<16x16xf32>
    %9 = tpu.matmul %7, %8, %cst_11 {dimension_numbers = #tpu.dot_dimension_numbers<[1], [0], [0], [1], [0, 0, 1, 1], [], []>} : vector<16x18xf32>, vector<18x16xf32>, vector<16x16xf32> -> vector<16x16xf32>
    %c0_12 = arith.constant 0 : index
    %c0_13 = arith.constant 0 : index
    %10 = vector.load %arg6[%c0_12, %c0_13] : memref<1x16xf32, #tpu.memory_space<vmem>>, vector<1x16xf32>
    %11 = vector.broadcast %10 : vector<1x16xf32> to vector<16x16xf32>
    %12 = arith.addf %9, %11 : vector<16x16xf32>
    %c0_14 = arith.constant 0 : index
    %c0_15 = arith.constant 0 : index
    %13 = vector.load %arg8[%c0_14, %c0_15] : memref<16x16xf32, #tpu.memory_space<vmem>>, vector<16x16xf32>
    tpu.vector_store %arg8[%c0_14, %c0_15], %12 {strides = array<i32>} : memref<16x16xf32, #tpu.memory_space<vmem>>, vector<16x16xf32>,
    return
  }
  func.func @transform_0(%arg0: i32) -> (i32, i32) {
    %c0_i32 = arith.constant 0 : i32
    %c0_i32_0 = arith.constant 0 : i32
    return %arg0, %c0_i32 : i32, i32
  }
  func.func @transform_1(%arg0: i32) -> (i32, i32) {
    %c0_i32 = arith.constant 0 : i32
    %c0_i32_0 = arith.constant 0 : i32
    return %arg0, %c0_i32 : i32, i32
  }
  func.func @transform_2(%arg0: i32) -> (i32, i32) {
    %c0_i32 = arith.constant 0 : i32
    %c0_i32_0 = arith.constant 0 : i32
    %c0_i32_1 = arith.constant 0 : i32
    return %c0_i32, %c0_i32_0 : i32, i32
  }
  func.func @transform_3(%arg0: i32) -> (i32, i32) {
    %c0_i32 = arith.constant 0 : i32
    %c0_i32_0 = arith.constant 0 : i32
    %c0_i32_1 = arith.constant 0 : i32
    return %c0_i32, %c0_i32_0 : i32, i32
  }
  func.func @transform_4(%arg0: i32) -> (i32, i32) {
    %c0_i32 = arith.constant 0 : i32
    %c0_i32_0 = arith.constant 0 : i32
    %c0_i32_1 = arith.constant 0 : i32
    return %c0_i32, %c0_i32_0 : i32, i32
  }
  func.func @transform_5(%arg0: i32) -> (i32, i32) {
    %c0_i32 = arith.constant 0 : i32
    %c0_i32_0 = arith.constant 0 : i32
    %c0_i32_1 = arith.constant 0 : i32
    return %c0_i32, %c0_i32_0 : i32, i32
  }
  func.func @transform_6(%arg0: i32) -> (i32, i32) {
    %c0_i32 = arith.constant 0 : i32
    %c0_i32_0 = arith.constant 0 : i32
    return %arg0, %c0_i32 : i32, i32
  }
  func.func @transform_7(%arg0: i32) -> (i32, i32) {
    %c0_i32 = arith.constant 0 : i32
    %c0_i32_0 = arith.constant 0 : i32
    return %arg0, %c0_i32 : i32, i32
  }
}

</mosaic_0001>

<llo_original>
// kernel: fused_embeddings.1
$region0: #{fused_embeddings.1}
  #allocation0 [shape = 'u32[]', space=smem, size = 0x4, offset = 0x4, fixed_abs, tag = 'smem constant byte address 0x4 - core index']
  #allocation1 [shape = 'u32[144,128]{1,0:T(1,128)}', space=vmem, size = 0x12000, scoped, tag = 'internal scratch']
  %s0 = inlined_call_operand.vmem [shape: f32[48,24], index: 0, kind: input, shape index: {}]
  %s1 = inlined_call_operand.vmem [shape: f32[48,18], index: 1, kind: input, shape index: {}]
  %s2 = inlined_call_operand.vmem [shape: f32[24,16], index: 2, kind: input, shape index: {}]
  %s3 = inlined_call_operand.vmem [shape: f32[1,16], index: 3, kind: input, shape index: {}]
  %s4 = inlined_call_operand.vmem [shape: f32[18,16], index: 4, kind: input, shape index: {}]
  %s5 = inlined_call_operand.vmem [shape: f32[1,16], index: 5, kind: input, shape index: {}]
  %s6 = inlined_call_operand.vmem [shape: f32[48,16], index: 6, kind: output, shape index: {0}]
  %s7 = inlined_call_operand.vmem [shape: f32[48,16], index: 7, kind: output, shape index: {1}]
  %8 = xla_tuple %s6, %s7
  %s9 = sld [smem:[#allocation0]]
  $region65: #{fused_embeddings.1} parent=0
    _
  %s11 = ssub.s32 1, %s9
  %s12 = scalar_select 0, %s11, %s9
  loop: start=0, step=1, limit=5
  $region2: #{fused_embeddings.1} parent=0 // loop_pre_header
    _
  $region3: #{fused_embeddings.1} parent=0 // loop_header
    %s14 = sphi 0, %s18
    %p15 = scmp.ge.s32.totalorder %s14, 5
    %s24 = sphi 0, %s26
    %s27 = sphi 0, %s24
    %s28 = sphi 0, %s27
    %s44 = sphi 0, %s28
    %s50 = sphi 0, %s52
    %s53 = sphi 0, %s50
    %s54 = sphi 0, %s53
    %s70 = sphi 0, %s54
    %s74 = sphi 0, %s74
    %s76 = sphi 0, %s74
    %s77 = sphi 0, %s76
    %s91 = sphi 0, %s77
    %s95 = sphi 0, %s95
    %s97 = sphi 0, %s95
    %s98 = sphi 0, %s97
    %s112 = sphi 0, %s98
    %s116 = sphi 0, %s116
    %s118 = sphi 0, %s116
    %s119 = sphi 0, %s118
    %s133 = sphi 0, %s119
    %s137 = sphi 0, %s137
    %s139 = sphi 0, %s137
    %s140 = sphi 0, %s139
    %s154 = sphi 0, %s140
    %s160 = sphi 0, %s162
    %s163 = sphi 0, %s160
    %s164 = sphi 0, %s163
    %s180 = sphi 0, %s164
    %s186 = sphi 0, %s188
    %s189 = sphi 0, %s186
    %s190 = sphi 0, %s189
    %s206 = sphi 0, %s190
  $region4: #{fused_embeddings.1} parent=0 // loop_header_branch
    %17 = sbr.rel (%p15) target = $region8
  $region5: #{fused_embeddings.1} parent=0 // loop_body
    %s19 = ssub.s32 %s14, 1
    %s20 = ssub.s32 %s14, 2
    %s21 = sadd.s32 %s14, 1
    %s22 = ssub.s32 %s14, %s21
    %p23 = scmp.eq.s32.totalorder %s22, 0
    %s25 = sadd.s32 %s24, 1
    %s26 = scalar_select %p23, %s24, %s25
    %p29 = pneg %p23
    %p30 = scmp.eq.s32.totalorder %s14, 2
    %p31 = por %p29, %p30
    %p32 = scmp.ne.s32.totalorder %s24, %s27
    %p33 = scmp.eq.s32.totalorder %s14, 0
    %p34 = por %p32, %p33
    %p35 = scmp.ne.s32.totalorder %s24, %s27
    %p36 = scmp.eq.s32.totalorder %s19, 2
    %p37 = por %p35, %p36
    %p38 = scmp.ne.s32.totalorder %s27, %s28
    %p39 = scmp.eq.s32.totalorder %s19, 0
    %p40 = por %p38, %p39
    %p41 = scmp.ne.s32.totalorder %s27, %s28
    %p42 = scmp.eq.s32.totalorder %s20, 2
    %p43 = por %p41, %p42
    %p45 = scmp.ne.s32.totalorder %s28, %s44
    %p46 = scmp.eq.s32.totalorder %s20, 0
    %p47 = por %p45, %p46
    %s48 = ssub.s32 %s14, %s21
    %p49 = scmp.eq.s32.totalorder %s48, 0
    %s51 = sadd.s32 %s50, 1
    %s52 = scalar_select %p49, %s50, %s51
    %p55 = pneg %p49
    %p56 = scmp.eq.s32.totalorder %s14, 2
    %p57 = por %p55, %p56
    %p58 = scmp.ne.s32.totalorder %s50, %s53
    %p59 = scmp.eq.s32.totalorder %s14, 0
    %p60 = por %p58, %p59
    %p61 = scmp.ne.s32.totalorder %s50, %s53
    %p62 = scmp.eq.s32.totalorder %s19, 2
    %p63 = por %p61, %p62
    %p64 = scmp.ne.s32.totalorder %s53, %s54
    %p65 = scmp.eq.s32.totalorder %s19, 0
    %p66 = por %p64, %p65
    %p67 = scmp.ne.s32.totalorder %s53, %s54
    %p68 = scmp.eq.s32.totalorder %s20, 2
    %p69 = por %p67, %p68
    %p71 = scmp.ne.s32.totalorder %s54, %s70
    %p72 = scmp.eq.s32.totalorder %s20, 0
    %p73 = por %p71, %p72
    %s75 = sadd.s32 %s74, 1
    %p78 = scmp.eq.s32.totalorder %s14, 2
    %p79 = scmp.ne.s32.totalorder %s74, %s76
    %p80 = scmp.eq.s32.totalorder %s14, 0
    %p81 = por %p79, %p80
    %p82 = scmp.ne.s32.totalorder %s74, %s76
    %p83 = scmp.eq.s32.totalorder %s19, 2
    %p84 = por %p82, %p83
    %p85 = scmp.ne.s32.totalorder %s76, %s77
    %p86 = scmp.eq.s32.totalorder %s19, 0
    %p87 = por %p85, %p86
    %p88 = scmp.ne.s32.totalorder %s76, %s77
    %p89 = scmp.eq.s32.totalorder %s20, 2
    %p90 = por %p88, %p89
    %p92 = scmp.ne.s32.totalorder %s77, %s91
    %p93 = scmp.eq.s32.totalorder %s20, 0
    %p94 = por %p92, %p93
    %s96 = sadd.s32 %s95, 1
    %p99 = scmp.eq.s32.totalorder %s14, 2
    %p100 = scmp.ne.s32.totalorder %s95, %s97
    %p101 = scmp.eq.s32.totalorder %s14, 0
    %p102 = por %p100, %p101
    %p103 = scmp.ne.s32.totalorder %s95, %s97
    %p104 = scmp.eq.s32.totalorder %s19, 2
    %p105 = por %p103, %p104
    %p106 = scmp.ne.s32.totalorder %s97, %s98
    %p107 = scmp.eq.s32.totalorder %s19, 0
    %p108 = por %p106, %p107
    %p109 = scmp.ne.s32.totalorder %s97, %s98
    %p110 = scmp.eq.s32.totalorder %s20, 2
    %p111 = por %p109, %p110
    %p113 = scmp.ne.s32.totalorder %s98, %s112
    %p114 = scmp.eq.s32.totalorder %s20, 0
    %p115 = por %p113, %p114
    %s117 = sadd.s32 %s116, 1
    %p120 = scmp.eq.s32.totalorder %s14, 2
    %p121 = scmp.ne.s32.totalorder %s116, %s118
    %p122 = scmp.eq.s32.totalorder %s14, 0
    %p123 = por %p121, %p122
    %p124 = scmp.ne.s32.totalorder %s116, %s118
    %p125 = scmp.eq.s32.totalorder %s19, 2
    %p126 = por %p124, %p125
    %p127 = scmp.ne.s32.totalorder %s118, %s119
    %p128 = scmp.eq.s32.totalorder %s19, 0
    %p129 = por %p127, %p128
    %p130 = scmp.ne.s32.totalorder %s118, %s119
    %p131 = scmp.eq.s32.totalorder %s20, 2
    %p132 = por %p130, %p131
    %p134 = scmp.ne.s32.totalorder %s119, %s133
    %p135 = scmp.eq.s32.totalorder %s20, 0
    %p136 = por %p134, %p135
    %s138 = sadd.s32 %s137, 1
    %p141 = scmp.eq.s32.totalorder %s14, 2
    %p142 = scmp.ne.s32.totalorder %s137, %s139
    %p143 = scmp.eq.s32.totalorder %s14, 0
    %p144 = por %p142, %p143
    %p145 = scmp.ne.s32.totalorder %s137, %s139
    %p146 = scmp.eq.s32.totalorder %s19, 2
    %p147 = por %p145, %p146
    %p148 = scmp.ne.s32.totalorder %s139, %s140
    %p149 = scmp.eq.s32.totalorder %s19, 0
    %p150 = por %p148, %p149
    %p151 = scmp.ne.s32.totalorder %s139, %s140
    %p152 = scmp.eq.s32.totalorder %s20, 2
    %p153 = por %p151, %p152
    %p155 = scmp.ne.s32.totalorder %s140, %s154
    %p156 = scmp.eq.s32.totalorder %s20, 0
    %p157 = por %p155, %p156
    %s158 = ssub.s32 %s14, %s21
    %p159 = scmp.eq.s32.totalorder %s158, 0
    %s161 = sadd.s32 %s160, 1
    %s162 = scalar_select %p159, %s160, %s161
    %p165 = pneg %p159
    %p166 = scmp.eq.s32.totalorder %s14, 2
    %p167 = por %p165, %p166
    %p168 = scmp.ne.s32.totalorder %s160, %s163
    %p169 = scmp.eq.s32.totalorder %s14, 0
    %p170 = por %p168, %p169
    %p171 = scmp.ne.s32.totalorder %s160, %s163
    %p172 = scmp.eq.s32.totalorder %s19, 2
    %p173 = por %p171, %p172
    %p174 = scmp.ne.s32.totalorder %s163, %s164
    %p175 = scmp.eq.s32.totalorder %s19, 0
    %p176 = por %p174, %p175
    %p177 = scmp.ne.s32.totalorder %s163, %s164
    %p178 = scmp.eq.s32.totalorder %s20, 2
    %p179 = por %p177, %p178
    %p181 = scmp.ne.s32.totalorder %s164, %s180
    %p182 = scmp.eq.s32.totalorder %s20, 0
    %p183 = por %p181, %p182
    %s184 = ssub.s32 %s14, %s21
    %p185 = scmp.eq.s32.totalorder %s184, 0
    %s187 = sadd.s32 %s186, 1
    %s188 = scalar_select %p185, %s186, %s187
    %p191 = pneg %p185
    %p192 = scmp.eq.s32.totalorder %s14, 2
    %p193 = por %p191, %p192
    %p194 = scmp.ne.s32.totalorder %s186, %s189
    %p195 = scmp.eq.s32.totalorder %s14, 0
    %p196 = por %p194, %p195
    %p197 = scmp.ne.s32.totalorder %s186, %s189
    %p198 = scmp.eq.s32.totalorder %s19, 2
    %p199 = por %p197, %p198
    %p200 = scmp.ne.s32.totalorder %s189, %s190
    %p201 = scmp.eq.s32.totalorder %s19, 0
    %p202 = por %p200, %p201
    %p203 = scmp.ne.s32.totalorder %s189, %s190
    %p204 = scmp.eq.s32.totalorder %s20, 2
    %p205 = por %p203, %p204
    %p207 = scmp.ne.s32.totalorder %s190, %s206
    %p208 = scmp.eq.s32.totalorder %s20, 0
    %p209 = por %p207, %p208
    %p210 = scmp.le.s32.totalorder 1, %s14
    %p211 = scmp.lt.s32.totalorder %s14, 4
    %p212 = pnand %p210, %p211
    %p213 = pneg %p212
    // Predicated region
    $region9: #{fused_embeddings.1} parent=5 // pred_check
      _
    $region10: #{fused_embeddings.1} parent=5 // pred_check_branch
      %215 = sbr.rel (%p212) target = $region12
    $region11: #{fused_embeddings.1} parent=5 // pred_region
      %s216 = ssub.s32 %s14, 1
      // Predicated region
      $region13: #{fused_embeddings.1} parent=11 // pred_check
        %p217 = pneg %p87
      $region14: #{fused_embeddings.1} parent=11 // pred_check_branch
        %219 = sbr.rel (%p217) target = $region16
      $region15: #{fused_embeddings.1} parent=11 // pred_region
        _
      $region16: #{fused_embeddings.1} parent=11 // pred_fallthru
        _
      // Predicated region
      $region17: #{fused_embeddings.1} parent=11 // pred_check
        %p220 = pneg %p108
      $region18: #{fused_embeddings.1} parent=11 // pred_check_branch
        %222 = sbr.rel (%p220) target = $region20
      $region19: #{fused_embeddings.1} parent=11 // pred_region
        _
      $region20: #{fused_embeddings.1} parent=11 // pred_fallthru
        _
      // Predicated region
      $region21: #{fused_embeddings.1} parent=11 // pred_check
        %p223 = pneg %p129
      $region22: #{fused_embeddings.1} parent=11 // pred_check_branch
        %225 = sbr.rel (%p223) target = $region24
      $region23: #{fused_embeddings.1} parent=11 // pred_region
        _
      $region24: #{fused_embeddings.1} parent=11 // pred_fallthru
        _
      // Predicated region
      $region25: #{fused_embeddings.1} parent=11 // pred_check
        %p226 = pneg %p150
      $region26: #{fused_embeddings.1} parent=11 // pred_check_branch
        %228 = sbr.rel (%p226) target = $region28
      $region27: #{fused_embeddings.1} parent=11 // pred_region
        _
      $region28: #{fused_embeddings.1} parent=11 // pred_fallthru
        _
    $region12: #{fused_embeddings.1} parent=5 // pred_fallthru
      _
    %p229 = scmp.lt.s32.totalorder %s14, 3
    // Predicated region
    $region29: #{fused_embeddings.1} parent=5 // pred_check
      %p230 = pneg %p229
    $region30: #{fused_embeddings.1} parent=5 // pred_check_branch
      %232 = sbr.rel (%p230) target = $region32
    $region31: #{fused_embeddings.1} parent=5 // pred_region
      // Predicated region
      $region33: #{fused_embeddings.1} parent=31 // pred_check
        %p233 = pneg %p34
      $region34: #{fused_embeddings.1} parent=31 // pred_check_branch
        %235 = sbr.rel (%p233) target = $region36
      $region35: #{fused_embeddings.1} parent=31 // pred_region
        %s236 = smul.u32 2, %s14
        %p237 = scmp.lt.s32.totalorder %s236, 5
        %s238 = scalar_select %p237, %s236, 5
        %s239 = smul.addr %s238, 8
        %s240 = scalar_lea.vmem %s0, %s239
        %s241 = smul.u32 2, %s14
      $region36: #{fused_embeddings.1} parent=31 // pred_fallthru
        _
      // Predicated region
      $region37: #{fused_embeddings.1} parent=31 // pred_check
        %p242 = pneg %p60
      $region38: #{fused_embeddings.1} parent=31 // pred_check_branch
        %244 = sbr.rel (%p242) target = $region40
      $region39: #{fused_embeddings.1} parent=31 // pred_region
        %s245 = smul.u32 2, %s14
        %p246 = scmp.lt.s32.totalorder %s245, 5
        %s247 = scalar_select %p246, %s245, 5
        %s248 = smul.addr %s247, 8
        %s249 = scalar_lea.vmem %s1, %s248
        %s250 = smul.u32 2, %s14
      $region40: #{fused_embeddings.1} parent=31 // pred_fallthru
        _
    $region32: #{fused_embeddings.1} parent=5 // pred_fallthru
      _
    %p251 = scmp.le.s32.totalorder 1, %s14
    %p252 = scmp.lt.s32.totalorder %s14, 4
    %p253 = pnand %p251, %p252
    %p254 = pneg %p253
    // Predicated region
    $region41: #{fused_embeddings.1} parent=5 // pred_check
      _
    $region42: #{fused_embeddings.1} parent=5 // pred_check_branch
      %256 = sbr.rel (%p253) target = $region44
    $region43: #{fused_embeddings.1} parent=5 // pred_region
      %s257 = ssub.s32 %s14, 1
      %s258 = smul.u32 2, %s19
      %p259 = scmp.lt.s32.totalorder %s258, 5
      %s260 = scalar_select %p259, %s258, 5
      %s261 = smul.addr %s260, 8
      %s262 = scalar_lea.vmem %s0, %s261
      %p263 = pneg %p40
      %p264 = pneg %p37
      %s265 = smul.u32 2, %s19
      %p266 = scmp.lt.s32.totalorder %s265, 5
      %s267 = scalar_select %p266, %s265, 5
      %s268 = smul.addr %s267, 8
      %s269 = scalar_lea.vmem %s1, %s268
      %p270 = pneg %p66
      %p271 = pneg %p63
      %p272 = pneg %p87
      %p273 = pneg %p84
      %p274 = pneg %p108
      %p275 = pneg %p105
      %p276 = pneg %p129
      %p277 = pneg %p126
      %p278 = pneg %p150
      %p279 = pneg %p147
      %p280 = pneg %p176
      %p281 = pneg %p173
      %s282 = smul.u32 2, %s19
      %p283 = scmp.lt.s32.totalorder %s282, 5
      %s284 = scalar_select %p283, %s282, 5
      %s285 = smul.addr %s284, 8
      %s286 = scalar_lea.vmem %s6, %s285
      %p287 = pneg %p202
      %p288 = pneg %p199
      %s289 = smul.u32 2, %s19
      %p290 = scmp.lt.s32.totalorder %s289, 5
      %s291 = scalar_select %p290, %s289, 5
      %s292 = smul.addr %s291, 8
      %s293 = scalar_lea.vmem %s7, %s292
      %s294 = smul.u32 2, %s19
      %p295 = scmp.lt.s32.totalorder %s294, 5
      %s296 = scalar_select %p295, %s294, 5
      %s297 = smul.addr %s296, 8
      %s298 = scalar_lea.vmem %s0, %s297
      %s299 = smul.u32 2, %s19
      %s300 = smul.u32 2, %s19
      %p301 = scmp.lt.s32.totalorder %s300, 5
      %s302 = scalar_select %p301, %s300, 5
      %s303 = smul.addr %s302, 8
      %s304 = scalar_lea.vmem %s1, %s303
      %s305 = smul.u32 2, %s19
      %s306 = smul.u32 2, %s19
      %p307 = scmp.lt.s32.totalorder %s306, 5
      %s308 = scalar_select %p307, %s306, 5
      %s309 = smul.addr %s308, 8
      %s310 = scalar_lea.vmem %s6, %s309
      %s311 = smul.u32 2, %s19
      %s312 = smul.u32 2, %s19
      %p313 = scmp.lt.s32.totalorder %s312, 5
      %s314 = scalar_select %p313, %s312, 5
      %s315 = smul.addr %s314, 8
      %s316 = scalar_lea.vmem %s7, %s315
      %s317 = smul.u32 2, %s19
      %v318 = vld [vmem:[%s298] sm:$0xff]
      %v319 = vld [vmem:[%s298 + $0x8] sm:$0xff]
      %v320 = vld [vmem:[%s2] sm:$0xff]
      %v321 = vld [vmem:[%s2 + $0x8] sm:$0xff]
      %v322 = vld [vmem:[%s2 + $0x10] sm:$0xff]
      %v323 = vld [vmem:[%s3] sm:$0x1]
      %v325 = vlaneseq
      %v326 = vshrl.u32 %v325, 7
      %v327 = vsub.s32 0, %v326
      %v328 = vrot.slane %v323, %v327
      %vm330 = vcmask 195584
      %v332 = vsel %vm330, %v318, 0
      %v335 = vsel %vm330, %v319, 0
      %337 = vmatprep.subr.mxu0 0.0
      %338 = vmatpush1.msra.mxu0 0.0
      %339 = vmatprep.subr.mxu0 0.0
      %340 = vmatpush1.msra.mxu0 0.0
      %341 = vmatprep.subr.mxu0 0.0
      %342 = vmatpush1.msra.mxu0 0.0
      %343 = vmatprep.subr.mxu0 0.0
      %344 = vmatpush1.msra.mxu0 0.0
      %345 = vmatprep.subr.mxu0 0.0
      %346 = vmatpush1.msra.mxu0 0.0
      %347 = vmatprep.subr.mxu0 0.0
      %348 = vmatpush1.msra.mxu0 0.0
      %349 = vmatprep.subr.mxu0 0.0
      %350 = vmatpush1.msra.mxu0 0.0
      %351 = vmatprep.subr.mxu0 0.0
      %352 = vmatpush1.msra.mxu0 0.0
      %353 = vmatprep.subr.mxu0 0.0
      %354 = vmatpush1.msra.mxu0 0.0
      %355 = vmatprep.subr.mxu0 0.0
      %356 = vmatpush1.msra.mxu0 0.0
      %357 = vmatprep.subr.mxu0 0.0
      %358 = vmatpush1.msra.mxu0 0.0
      %359 = vmatprep.subr.mxu0 0.0
      %360 = vmatpush1.msra.mxu0 0.0
      %361 = vmatprep.subr.mxu0 0.0
      %362 = vmatpush1.msra.mxu0 0.0
      %363 = vmatprep.subr.mxu0 0.0
      %364 = vmatpush1.msra.mxu0 %v322
      %365 = vmatprep.subr.mxu0 0.0
      %366 = vmatpush1.msra.mxu0 %v321
      %367 = vmatprep.subr.mxu0 0.0
      %368 = vmatpush1.msra.mxu0 %v320
      %369 = vmatprep.subr.mxu0 0.0
      %370 = vmatpush2.msra.mxu0 0.0
      %371 = vmatprep.subr.mxu0 0.0
      %372 = vmatpush2.msra.mxu0 0.0
      %373 = vmatprep.subr.mxu0 0.0
      %374 = vmatpush2.msra.mxu0 0.0
      %375 = vmatprep.subr.mxu0 0.0
      %376 = vmatpush2.msra.mxu0 0.0
      %377 = vmatprep.subr.mxu0 0.0
      %378 = vmatpush2.msra.mxu0 0.0
      %379 = vmatprep.subr.mxu0 0.0
      %380 = vmatpush2.msra.mxu0 0.0
      %381 = vmatprep.subr.mxu0 0.0
      %382 = vmatpush2.msra.mxu0 0.0
      %383 = vmatprep.subr.mxu0 0.0
      %384 = vmatpush2.msra.mxu0 0.0
      %385 = vmatprep.subr.mxu0 0.0
      %386 = vmatpush2.msra.mxu0 0.0
      %387 = vmatprep.subr.mxu0 0.0
      %388 = vmatpush2.msra.mxu0 0.0
      %389 = vmatprep.subr.mxu0 0.0
      %390 = vmatpush2.msra.mxu0 0.0
      %391 = vmatprep.subr.mxu0 0.0
      %392 = vmatpush2.msra.mxu0 0.0
      %393 = vmatprep.subr.mxu0 0.0
      %394 = vmatpush2.msra.mxu0 0.0
      %395 = vmatprep.subr.mxu0 0.0
      %396 = vmatpush2.msra.mxu0 0.0
      %397 = vmatprep.subr.mxu0 0.0
      %398 = vmatpush2.msra.mxu0 0.0
      %399 = vmatprep.subr.mxu0 0.0
      %400 = vmatpush2.msra.mxu0 0.0
      %401 = vmatprep.mubr.f32.mxu0 0.0
      %402 = vmatmul.mubr.f32.gmra.mxu0 %v332
      %v403 = vpop.f32.mrf.mxu0
      %v404 = vadd.f32 %v328, %v403
      %v405 = vpop.f32.mrf.mxu0
      %406 = vmatprep.mubr.f32.mxu0 0.0
      %407 = vmatmul.mubr.f32.gmra.mxu0 %v335
      %v408 = vpop.f32.mrf.mxu0
      %v409 = vadd.f32 %v328, %v408
      %v410 = vpop.f32.mrf.mxu0
      %411 = vdwg.mxu0
      %vm412 = vcmask 130048
      %413 = vst.msk [vmem:[%s310] sm:$0xff] %vm412, %v404
      %414 = vst.msk [vmem:[%s310 + $0x8] sm:$0xff] %vm412, %v409
      %v415 = vld [vmem:[%s304] sm:$0xff]
      %v416 = vld [vmem:[%s304 + $0x8] sm:$0xff]
      %v417 = vld [vmem:[%s4] sm:$0xff]
      %v418 = vld [vmem:[%s4 + $0x8] sm:$0xff]
      %v419 = vld [vmem:[%s4 + $0x10] sm:$0x3]
      %v420 = vld [vmem:[%s5] sm:$0x1]
      %v422 = vlaneseq
      %v423 = vshrl.u32 %v422, 7
      %v424 = vsub.s32 0, %v423
      %v425 = vrot.slane %v420, %v424
      %vm427 = vcmask 146432
      %v429 = vsel %vm427, %v415, 0
      %v432 = vsel %vm427, %v416, 0
      %vm434 = vcmask 1041408
      %v436 = vsel %vm434, %v419, 0
      %438 = vmatprep.subr.mxu0 0.0
      %439 = vmatpush1.msra.mxu0 0.0
      %440 = vmatprep.subr.mxu0 0.0
      %441 = vmatpush1.msra.mxu0 0.0
      %442 = vmatprep.subr.mxu0 0.0
      %443 = vmatpush1.msra.mxu0 0.0
      %444 = vmatprep.subr.mxu0 0.0
      %445 = vmatpush1.msra.mxu0 0.0
      %446 = vmatprep.subr.mxu0 0.0
      %447 = vmatpush1.msra.mxu0 0.0
      %448 = vmatprep.subr.mxu0 0.0
      %449 = vmatpush1.msra.mxu0 0.0
      %450 = vmatprep.subr.mxu0 0.0
      %451 = vmatpush1.msra.mxu0 0.0
      %452 = vmatprep.subr.mxu0 0.0
      %453 = vmatpush1.msra.mxu0 0.0
      %454 = vmatprep.subr.mxu0 0.0
      %455 = vmatpush1.msra.mxu0 0.0
      %456 = vmatprep.subr.mxu0 0.0
      %457 = vmatpush1.msra.mxu0 0.0
      %458 = vmatprep.subr.mxu0 0.0
      %459 = vmatpush1.msra.mxu0 0.0
      %460 = vmatprep.subr.mxu0 0.0
      %461 = vmatpush1.msra.mxu0 0.0
      %462 = vmatprep.subr.mxu0 0.0
      %463 = vmatpush1.msra.mxu0 0.0
      %464 = vmatprep.subr.mxu0 0.0
      %465 = vmatpush1.msra.mxu0 %v436
      %466 = vmatprep.subr.mxu0 0.0
      %467 = vmatpush1.msra.mxu0 %v418
      %468 = vmatprep.subr.mxu0 0.0
      %469 = vmatpush1.msra.mxu0 %v417
      %470 = vmatprep.subr.mxu0 0.0
      %471 = vmatpush2.msra.mxu0 0.0
      %472 = vmatprep.subr.mxu0 0.0
      %473 = vmatpush2.msra.mxu0 0.0
      %474 = vmatprep.subr.mxu0 0.0
      %475 = vmatpush2.msra.mxu0 0.0
      %476 = vmatprep.subr.mxu0 0.0
      %477 = vmatpush2.msra.mxu0 0.0
      %478 = vmatprep.subr.mxu0 0.0
      %479 = vmatpush2.msra.mxu0 0.0
      %480 = vmatprep.subr.mxu0 0.0
      %481 = vmatpush2.msra.mxu0 0.0
      %482 = vmatprep.subr.mxu0 0.0
      %483 = vmatpush2.msra.mxu0 0.0
      %484 = vmatprep.subr.mxu0 0.0
      %485 = vmatpush2.msra.mxu0 0.0
      %486 = vmatprep.subr.mxu0 0.0
      %487 = vmatpush2.msra.mxu0 0.0
      %488 = vmatprep.subr.mxu0 0.0
      %489 = vmatpush2.msra.mxu0 0.0
      %490 = vmatprep.subr.mxu0 0.0
      %491 = vmatpush2.msra.mxu0 0.0
      %492 = vmatprep.subr.mxu0 0.0
      %493 = vmatpush2.msra.mxu0 0.0
      %494 = vmatprep.subr.mxu0 0.0
      %495 = vmatpush2.msra.mxu0 0.0
      %496 = vmatprep.subr.mxu0 0.0
      %497 = vmatpush2.msra.mxu0 0.0
      %498 = vmatprep.subr.mxu0 0.0
      %499 = vmatpush2.msra.mxu0 0.0
      %500 = vmatprep.subr.mxu0 0.0
      %501 = vmatpush2.msra.mxu0 0.0
      %502 = vmatprep.mubr.f32.mxu0 0.0
      %503 = vmatmul.mubr.f32.gmra.mxu0 %v429
      %v504 = vpop.f32.mrf.mxu0
      %v505 = vadd.f32 %v425, %v504
      %v506 = vpop.f32.mrf.mxu0
      %507 = vmatprep.mubr.f32.mxu0 0.0
      %508 = vmatmul.mubr.f32.gmra.mxu0 %v432
      %v509 = vpop.f32.mrf.mxu0
      %v510 = vadd.f32 %v425, %v509
      %v511 = vpop.f32.mrf.mxu0
      %512 = vdwg.mxu0
      %513 = vst.msk [vmem:[%s316] sm:$0xff] %vm412, %v505
      %514 = vst.msk [vmem:[%s316 + $0x8] sm:$0xff] %vm412, %v510
      %s515 = smul.u32 2, %s19
      %p516 = scmp.lt.s32.totalorder %s515, 5
      %s517 = scalar_select %p516, %s515, 5
      %s518 = smul.addr %s517, 8
      %s519 = scalar_lea.vmem %s6, %s518
      %s520 = smul.u32 2, %s19
      %p521 = scmp.lt.s32.totalorder %s520, 5
      %s522 = scalar_select %p521, %s520, 5
      %s523 = smul.addr %s522, 8
      %s524 = scalar_lea.vmem %s7, %s523
      // Predicated region
      $region45: #{fused_embeddings.1} parent=43 // pred_check
        %p525 = pneg %p173
      $region46: #{fused_embeddings.1} parent=43 // pred_check_branch
        %527 = sbr.rel (%p525) target = $region48
      $region47: #{fused_embeddings.1} parent=43 // pred_region
        %s528 = smul.u32 2, %s19
      $region48: #{fused_embeddings.1} parent=43 // pred_fallthru
        _
      // Predicated region
      $region49: #{fused_embeddings.1} parent=43 // pred_check
        %p529 = pneg %p199
      $region50: #{fused_embeddings.1} parent=43 // pred_check_branch
        %531 = sbr.rel (%p529) target = $region52
      $region51: #{fused_embeddings.1} parent=43 // pred_region
        %s532 = smul.u32 2, %s19
      $region52: #{fused_embeddings.1} parent=43 // pred_fallthru
        _
    $region44: #{fused_embeddings.1} parent=5 // pred_fallthru
      _
    %p533 = scmp.le.s32.totalorder 2, %s14
    // Predicated region
    $region53: #{fused_embeddings.1} parent=5 // pred_check
      %p534 = pneg %p533
    $region54: #{fused_embeddings.1} parent=5 // pred_check_branch
      %536 = sbr.rel (%p534) target = $region56
    $region55: #{fused_embeddings.1} parent=5 // pred_region
      %s537 = ssub.s32 %s14, 2
      // Predicated region
      $region57: #{fused_embeddings.1} parent=55 // pred_check
        %p538 = pneg %p179
      $region58: #{fused_embeddings.1} parent=55 // pred_check_branch
        %540 = sbr.rel (%p538) target = $region60
      $region59: #{fused_embeddings.1} parent=55 // pred_region
        %s541 = smul.u32 2, %s20
        %p542 = scmp.lt.s32.totalorder %s541, 5
        %s543 = scalar_select %p542, %s541, 5
        %s544 = smul.addr %s543, 8
        %s545 = scalar_lea.vmem %s6, %s544
      $region60: #{fused_embeddings.1} parent=55 // pred_fallthru
        _
      // Predicated region
      $region61: #{fused_embeddings.1} parent=55 // pred_check
        %p546 = pneg %p205
      $region62: #{fused_embeddings.1} parent=55 // pred_check_branch
        %548 = sbr.rel (%p546) target = $region64
      $region63: #{fused_embeddings.1} parent=55 // pred_region
        %s549 = smul.u32 2, %s20
        %p550 = scmp.lt.s32.totalorder %s549, 5
        %s551 = scalar_select %p550, %s549, 5
        %s552 = smul.addr %s551, 8
        %s553 = scalar_lea.vmem %s7, %s552
      $region64: #{fused_embeddings.1} parent=55 // pred_fallthru
        _
    $region56: #{fused_embeddings.1} parent=5 // pred_fallthru
      _
  $region6: #{fused_embeddings.1} parent=0 // loop_footer
    %s18 = sadd.s32 1, %s14
  $region7: #{fused_embeddings.1} parent=0 // loop_footer_branch
    %13 = sbr.rel target = $region3
  $region8: #{fused_embeddings.1} parent=0 // loop_exit
    _

</llo_original>
